<compile_context>
chip_gen: v5e
topology: v5e:2x2
jax: 0.10.0
libtpu: 0.0.40
codegen_flags: <defaults>
</compile_context>

<pallas_src>
import functools
import math

import jax
import jax.numpy as jnp
from jax.experimental import pallas as pl
from jax.experimental.pallas import tpu as pltpu


def _round_up(a: int, b: int) -> int:
    return -(-a // b) * b


def _vmem_capacity_bytes() -> int:
    """Physical VMEM per TensorCore; falls back to 128 MiB if unqueryable."""
    try:
        return int(pltpu.get_tpu_info().vmem_capacity_bytes)
    except Exception:
        return 128 * 1024 * 1024


def _label_smoothing_kernel(n_ref, x_ref, x_tgt_ref, out_ref, *,
                            smooth_val: float, confidence: float):
    i = pl.program_id(0)
    tile_n, m = x_ref.shape

    x = x_ref[...].astype(jnp.float32)                       # (tile_n, M)
    x_max = jnp.max(x, axis=-1, keepdims=True)                # (tile_n, 1)
    z = x - x_max                                             # (tile_n, M)
    lse = jnp.log(jnp.sum(jnp.exp(z), axis=-1, keepdims=True))  # (tile_n, 1)
    sum_z = jnp.sum(z, axis=-1, keepdims=True)                # (tile_n, 1)
    z_tgt = x_tgt_ref[...] - x_max                            # (tile_n, 1)

    # per-row  sum_j t_j * logp_j   with  logp = z - lse  and two-valued t
    row_t_logp = (jnp.float32(smooth_val) * (sum_z - jnp.float32(m) * lse)
                  + jnp.float32(confidence - smooth_val) * (z_tgt - lse))

    # Mask rows past the real N (ragged last block holds undefined data;
    # select keeps any NaN/Inf there from leaking into the sum).
    row_ids = i * tile_n + jax.lax.broadcasted_iota(jnp.int32, (tile_n, 1), 0)
    partial = jnp.sum(jnp.where(row_ids < n_ref[0], row_t_logp, 0.0))

    # Per-block partial of -sum(t*logp), broadcast into a full (1,8,128) block
    # so the store is unmasked/lane-dense.
    out_ref[...] = jnp.full(out_ref.shape, -partial, dtype=jnp.float32)


def label_smoothing_loss(x, target, smoothing=0.0, *, tile_n=None):
    """x: (N, M) logits (f32/bf16), target: (N,) int -> scalar f32 KL-div sum."""
    n, m = x.shape
    if m < 2:
        raise ValueError("LabelSmoothing requires at least 2 classes (M >= 2).")

    smoothing = float(smoothing)
    confidence = 1.0 - smoothing
    smooth_val = smoothing / (m - 1)

    def _xlogx(t):
        return t * math.log(t) if t > 0.0 else 0.0

    # sum(t * log t) over the whole batch is a trace-time constant.
    entropy_const = n * (_xlogx(confidence) + (m - 1) * _xlogx(smooth_val))

    itemsize = int(jnp.dtype(x.dtype).itemsize)
    # Sublane granularity: 8 rows for 32-bit, 16 for bf16, 32 for 8-bit dtypes.
    row_mult = 8 * max(1, 4 // itemsize)

    cap = _vmem_capacity_bytes()
    # ~4 MiB x-blocks on 64-MiB-VMEM chips (v7x), ~8 MiB on 128-MiB (v5e/v6e).
    x_block_budget = (4 << 20) if cap <= (64 << 20) else (8 << 20)

    if tile_n is None:
        tile_n = max(row_mult,
                     (x_block_budget // (m * itemsize)) // row_mult * row_mult)
    tile_n = int(min(_round_up(int(tile_n), row_mult), _round_up(n, row_mult)))
    num_blocks = -(-n // tile_n)

    # Scoped-VMEM budget: 2x double-buffered x blocks + ~4 full-tile f32
    # elementwise temporaries + small row vectors / output blocks + headroom.
    block_in = tile_n * m * itemsize
    block_f32 = tile_n * m * 4
    est_vmem = (2 * block_in + 4 * block_f32
                + 4 * tile_n * 4 + 2 * 8 * 128 * 4 + (1 << 20))
    vmem_limit = int(min(cap - (4 << 20), max(32 << 20, est_vmem)))

    # Gather x[row, target[row]] outside the kernel (N scalars, cheap).
    x_tgt = jnp.take_along_axis(
        x, target.astype(jnp.int32).reshape(n, 1), axis=-1).astype(jnp.float32)
    n_arr = jnp.asarray([n], dtype=jnp.int32)

    kernel = functools.partial(_label_smoothing_kernel,
                               smooth_val=smooth_val, confidence=confidence)

    grid_spec = pltpu.PrefetchScalarGridSpec(
        num_scalar_prefetch=1,
        grid=(num_blocks,),
        in_specs=[
            pl.BlockSpec((tile_n, m), lambda i, n_ref: (i, 0)),
            pl.BlockSpec((tile_n, 1), lambda i, n_ref: (i, 0)),
        ],
        out_specs=pl.BlockSpec((1, 8, 128), lambda i, n_ref: (i, 0, 0)),
    )

    partials = pl.pallas_call(
        kernel,
        out_shape=jax.ShapeDtypeStruct((num_blocks, 8, 128), jnp.float32),
        grid_spec=grid_spec,
        compiler_params=pltpu.CompilerParams(
            dimension_semantics=("parallel",),
            vmem_limit_bytes=vmem_limit),
        cost_estimate=pl.CostEstimate(
            flops=int(5 * n * m),
            transcendentals=int(n * m + n),
            bytes_accessed=int(n * m * itemsize + 8 * n
                               + num_blocks * 8 * 128 * 4)),
    )(n_arr, x, x_tgt)

    # loss = sum(t*log t) - sum(t*logp); partials already carry the minus sign.
    return jnp.float32(entropy_const) + jnp.sum(partials[:, 0, 0])


def _reference(x, target, smoothing):
    """Pure-JAX reference of the PyTorch forward (KLDivLoss, sum reduction)."""
    n, m = x.shape
    logp = jax.nn.log_softmax(x.astype(jnp.float32), axis=-1)
    confidence = 1.0 - smoothing
    smooth_val = smoothing / (m - 1)
    true_dist = jnp.full((n, m), smooth_val, dtype=jnp.float32)
    true_dist = true_dist.at[jnp.arange(n), target].set(confidence)
    t_log_t = jnp.where(true_dist > 0,
                        true_dist * jnp.log(jnp.where(true_dist > 0,
                                                      true_dist, 1.0)),
                        0.0)
    return jnp.sum(t_log_t - true_dist * logp)


if __name__ == "__main__":
    key = jax.random.PRNGKey(0)

    # Case 1: small aligned shape.
    kx, kt = jax.random.split(jax.random.fold_in(key, 0))
    N, M, smoothing = 8, 32, 0.1
    x = jax.random.normal(kx, (N, M), dtype=jnp.float32)
    target = jax.random.randint(kt, (N,), 0, M, dtype=jnp.int32)
    loss = jax.block_until_ready(label_smoothing_loss(x, target, smoothing))
    ref = _reference(x, target, smoothing)
    assert jnp.allclose(loss, ref, rtol=1e-4, atol=1e-4), (loss, ref)

    # Case 2: ragged N (exercises the no-pad partial-block + row-mask path).
    kx, kt = jax.random.split(jax.random.fold_in(key, 1))
    N, M, smoothing = 13, 50, 0.2
    x = jax.random.normal(kx, (N, M), dtype=jnp.float32)
    target = jax.random.randint(kt, (N,), 0, M, dtype=jnp.int32)
    loss = jax.block_until_ready(label_smoothing_loss(x, target, smoothing))
    ref = _reference(x, target, smoothing)
    assert jnp.allclose(loss, ref, rtol=1e-4, atol=1e-4), (loss, ref)

    # Case 3: multi-block parallel grid (forced small tile, N > tile_n).
    kx, kt = jax.random.split(jax.random.fold_in(key, 2))
    N, M, smoothing = 24, 32, 0.1
    x = jax.random.normal(kx, (N, M), dtype=jnp.float32)
    target = jax.random.randint(kt, (N,), 0, M, dtype=jnp.int32)
    loss = jax.block_until_ready(
        label_smoothing_loss(x, target, smoothing, tile_n=8))
    ref = _reference(x, target, smoothing)
    assert jnp.allclose(loss, ref, rtol=1e-4, atol=1e-4), (loss, ref)

    # Case 4: bf16 logits kept in native dtype through the BlockSpec.
    kx, kt = jax.random.split(jax.random.fold_in(key, 3))
    N, M, smoothing = 16, 64, 0.1
    x = jax.random.normal(kx, (N, M), dtype=jnp.bfloat16)
    target = jax.random.randint(kt, (N,), 0, M, dtype=jnp.int32)
    loss = jax.block_until_ready(label_smoothing_loss(x, target, smoothing))
    ref = _reference(x, target, smoothing)
    assert jnp.allclose(loss, ref, rtol=1e-3, atol=1e-3), (loss, ref)

    print("KERNEL_OK")
</pallas_src>

<mosaic_0001>
module attributes {stable_mosaic.version = 11 : i64} {
  func.func @_label_smoothing_kernel(%arg0: i32, %arg1: memref<1xi32, #tpu.memory_space<smem>>, %arg2: memref<8x32xf32, #tpu.memory_space<vmem>>, %arg3: memref<8x1xf32, #tpu.memory_space<vmem>>, %arg4: memref<1x8x128xf32, #tpu.memory_space<vmem>>) attributes {dimension_semantics = [#tpu.dimension_semantics<parallel>], iteration_bounds = array<i64: 1>, scalar_prefetch = 1 : i64, scratch_operands = 0 : i64, tpu.core_type = #tpu.core_type<tc>, window_params = [{transform_indices = @transform_0, window_bounds = array<i64: 8, 32>}, {transform_indices = @transform_1, window_bounds = array<i64: 8, 1>}, {transform_indices = @transform_2, window_bounds = array<i64: 1, 8, 128>}]} {
    %c0 = arith.constant 0 : index
    %c0_0 = arith.constant 0 : index
    %0 = vector.load %arg2[%c0, %c0_0] : memref<8x32xf32, #tpu.memory_space<vmem>>, vector<8x32xf32>
    %cst = arith.constant dense<0xFF800000> : vector<8xf32>
    %1 = vector.multi_reduction <maximumf>, %0, %cst [1] : vector<8x32xf32> to vector<8xf32>
    %2 = vector.shape_cast %1 : vector<8xf32> to vector<8x1xf32>
    %3 = vector.broadcast %2 : vector<8x1xf32> to vector<8x32xf32>
    %4 = arith.subf %0, %3 : vector<8x32xf32>
    %5 = math.exp %4 : vector<8x32xf32>
    %cst_1 = arith.constant dense<0.000000e+00> : vector<8xf32>
    %6 = vector.multi_reduction <add>, %5, %cst_1 [1] : vector<8x32xf32> to vector<8xf32>
    %7 = vector.shape_cast %6 : vector<8xf32> to vector<8x1xf32>
    %8 = math.log %7 : vector<8x1xf32>
    %cst_2 = arith.constant dense<0.000000e+00> : vector<8xf32>
    %9 = vector.multi_reduction <add>, %4, %cst_2 [1] : vector<8x32xf32> to vector<8xf32>
    %10 = vector.shape_cast %9 : vector<8xf32> to vector<8x1xf32>
    %c0_3 = arith.constant 0 : index
    %c0_4 = arith.constant 0 : index
    %11 = vector.load %arg3[%c0_3, %c0_4] : memref<8x1xf32, #tpu.memory_space<vmem>>, vector<8x1xf32>
    %12 = arith.subf %11, %2 : vector<8x1xf32>
    %cst_5 = arith.constant 3.200000e+01 : f32
    %13 = vector.broadcast %cst_5 : f32 to vector<8x1xf32>
    %14 = arith.mulf %13, %8 : vector<8x1xf32>
    %15 = arith.subf %10, %14 : vector<8x1xf32>
    %cst_6 = arith.constant 0.0032258064 : f32
    %16 = vector.broadcast %cst_6 : f32 to vector<8x1xf32>
    %17 = arith.mulf %16, %15 : vector<8x1xf32>
    %18 = arith.subf %12, %8 : vector<8x1xf32>
    %cst_7 = arith.constant 0.896774172 : f32
    %19 = vector.broadcast %cst_7 : f32 to vector<8x1xf32>
    %20 = arith.mulf %19, %18 : vector<8x1xf32>
    %21 = arith.addf %17, %20 : vector<8x1xf32>
    %c8_i32 = arith.constant 8 : i32
    %22 = arith.muli %arg0, %c8_i32 : i32
    %23 = tpu.iota {dimensions = array<i32: 0>} : vector<8x1xi32>
    %24 = vector.broadcast %22 : i32 to vector<8x1xi32>
    %25 = arith.addi %24, %23 : vector<8x1xi32>
    %c0_8 = arith.constant 0 : index
    %26 = memref.load %arg1[%c0_8] : memref<1xi32, #tpu.memory_space<smem>>
    %27 = vector.broadcast %26 : i32 to vector<8x1xi32>
    %28 = arith.cmpi slt, %25, %27 : vector<8x1xi32>
    %cst_9 = arith.constant 0.000000e+00 : f32
    %29 = vector.broadcast %cst_9 : f32 to vector<8x1xf32>
    %30 = arith.select %28, %21, %29 : vector<8x1xi1>, vector<8x1xf32>
    %31 = vector.shape_cast %30 : vector<8x1xf32> to vector<1x8x1xf32>
    %cst_10 = arith.constant dense<0.000000e+00> : vector<1xf32>
    %32 = vector.multi_reduction <add>, %31, %cst_10 [1, 2] : vector<1x8x1xf32> to vector<1xf32>
    %33 = vector.shape_cast %32 : vector<1xf32> to vector<1x1x1xf32>
    %34 = vector.extract %33[0, 0, 0] : f32 from vector<1x1x1xf32>
    %cst_11 = arith.constant 0.000000e+00 : f32
    %35 = arith.subf %cst_11, %34 : f32
    %36 = vector.broadcast %35 : f32 to vector<1x8x128xf32>
    %c0_12 = arith.constant 0 : index
    %c0_13 = arith.constant 0 : index
    %c0_14 = arith.constant 0 : index
    %37 = vector.load %arg4[%c0_12, %c0_13, %c0_14] : memref<1x8x128xf32, #tpu.memory_space<vmem>>, vector<1x8x128xf32>
    tpu.vector_store %arg4[%c0_12, %c0_13, %c0_14], %36 {strides = array<i32>} : memref<1x8x128xf32, #tpu.memory_space<vmem>>, vector<1x8x128xf32>,
    return
  }
  func.func @transform_0(%arg0: i32, %arg1: memref<1xi32, #tpu.memory_space<smem>>) -> (i32, i32) {
    %c0_i32 = arith.constant 0 : i32
    %c0_i32_0 = arith.constant 0 : i32
    return %arg0, %c0_i32 : i32, i32
  }
  func.func @transform_1(%arg0: i32, %arg1: memref<1xi32, #tpu.memory_space<smem>>) -> (i32, i32) {
    %c0_i32 = arith.constant 0 : i32
    %c0_i32_0 = arith.constant 0 : i32
    return %arg0, %c0_i32 : i32, i32
  }
  func.func @transform_2(%arg0: i32, %arg1: memref<1xi32, #tpu.memory_space<smem>>) -> (i32, i32, i32) {
    %c0_i32 = arith.constant 0 : i32
    %c0_i32_0 = arith.constant 0 : i32
    %c0_i32_1 = arith.constant 0 : i32
    return %arg0, %c0_i32, %c0_i32_0 : i32, i32, i32
  }
}

</mosaic_0001>

<llo_original>
// kernel: tpu_custom_call.1
$region0: #{tpu_custom_call.1}
  #allocation0 [shape = 'u32[]', space=smem, size = 0x4, offset = 0x4, fixed_abs, tag = 'smem constant byte address 0x4 - core index']
  #allocation1 [shape = 'u32[72,128]{1,0:T(1,128)}', space=vmem, size = 0x9000, scoped, tag = 'internal scratch']
  #allocation2 [shape = 's32[1]{0}', space=sflag, size = 0x4, scoped, tag = 'scoped memory for tpu_custom_call.1']
  #allocation3 [shape = 's32[1]{0:T(128)S(6)}', space=smem, size = 0x200, scoped, tag = 'prefetched SMEM operand 0']
  %s0 = inlined_call_operand.<no memory space> [shape: s32[1], index: 0, kind: input, shape index: {}]
  %s1 = inlined_call_operand.vmem [shape: f32[8,32], index: 1, kind: input, shape index: {}]
  %s2 = inlined_call_operand.vmem [shape: f32[8,1], index: 2, kind: input, shape index: {}]
  %s3 = inlined_call_operand.hbm [shape: f32[1,8,128], index: 3, kind: output, shape index: {}]
  %s4 = sld [smem:[#allocation0]]
  $region18: #{tpu_custom_call.1} parent=0
    _
  %s6 = ssub.s32 1, %s4
  %s7 = scalar_select 0, %s6, %s4
  %8 = sst [smem:[#allocation3]] %s0
  $region1: #{tpu_custom_call.1} parent=0
    #allocation4 [shape = 'u8[4096]{0}', space=vmem, size = 0x1000, scoped, tag = 'output window, operand 0, single buffered']
    #allocation5 [shape = 's32[1]{0}', space=sflag, size = 0x4, scoped, tag = 'scoped memory for tpu_custom_call.1']
    %9 = vsyncpa [#allocation5], 0
    // Predicated region
    $region2: #{tpu_custom_call.1} parent=1 // pred_check
      _
    $region3: #{tpu_custom_call.1} parent=1 // pred_check_branch
      %11 = sbr.rel (0) target = $region5
    $region4: #{tpu_custom_call.1} parent=1 // pred_region
      _
    $region5: #{tpu_custom_call.1} parent=1 // pred_fallthru
      _
    // Predicated region
    $region6: #{tpu_custom_call.1} parent=1 // pred_check
      _
    $region7: #{tpu_custom_call.1} parent=1 // pred_check_branch
      %13 = sbr.rel (0) target = $region9
    $region8: #{tpu_custom_call.1} parent=1 // pred_region
      _
    $region9: #{tpu_custom_call.1} parent=1 // pred_fallthru
      _
    %v14 = vld [vmem:[%s1] sm:$0xff]
    %vm15 = vcmask 261120
    %v16 = vsel %vm15, %v14, -inf
    %17 = vmax.xlane.f32.xlu0 %v16
    %v18 = vpop.xlane.xlu0 %17
    %v19 = vsub.f32 %v14, %v18
    %v20 = vmul.f32 %v19, 1.442695
    %v21 = vpow.pop %v20
    %v22 = vsel %vm15, %v21, 0.0
    %23 = vadd.xlane.f32.xlu0 %v22
    %v24 = vpop.xlane.xlu0 %23
    %v25 = vlog2.pop %v24
    %v26 = vmul.f32 %v25, 0.6931472
    %v27 = vsel %vm15, %v19, 0.0
    %28 = vadd.xlane.f32.xlu0 %v27
    %v29 = vpop.xlane.xlu0 %28
    %v30 = vld [vmem:[%s2] sm:$0xff]
    %v31 = vsub.f32 %v30, %v18
    %v32 = vmul.f32 %v26, 32.0
    %v33 = vsub.f32 %v29, %v32
    %v34 = vmul.f32 %v33, 0.0032258064
    %v35 = vsub.f32 %v31, %v26
    %v36 = vmul.f32 %v35, 0.8967742
    %v37 = vadd.f32 %v34, %v36
    %s38 = smul.u32 0, 8
    %v39 = vlaneseq
    %v40 = vshrl.u32 %v39, 7
    %v41 = vstv %s38
    %v42 = vadd.s32 %v41, %v40
    %s43 = sld [smem:[#allocation3]]
    %v44 = vstv %s43
    %vm45 = vcmp.lt.s32.totalorder %v42, %v44
    %v46 = vsel %vm45, %v37, 0.0
    %vm47 = vcmask 7168
    %v48 = vsel %vm47, %v46, 0.0
    %49 = vadd.xlane.f32.xlu0 %v48
    %v50 = vpop.xlane.xlu0 %49
    %v51 = vrot.slane %v50, 4
    %v52 = vadd.f32 %v50, %v51
    %v53 = vrot.slane %v52, 2
    %v54 = vadd.f32 %v52, %v53
    %v55 = vrot.slane %v54, 1
    %v56 = vadd.f32 %v54, %v55
    %s57 = vtos %v56
    %s58 = ssub.f32 0.0, %s57
    %v59 = vstv %s58
    %60 = vst [vmem:[#allocation4] sm:$0xff] %v59
    // Predicated region
    $region10: #{tpu_custom_call.1} parent=1 // pred_check
      _
    $region11: #{tpu_custom_call.1} parent=1 // pred_check_branch
      %62 = sbr.rel (0) target = $region13
    $region12: #{tpu_custom_call.1} parent=1 // pred_region
      %64 = vsyncadd [#allocation5], 0
      %s66 = sshll.u32 [#allocation4], 4
      %s67 = int_to_ptr.vmem [resolvable:$true] %s66
      %s68 = sshll.u32 %s3, 4
      %s69 = int_to_ptr.hbm [resolvable:$true] %s68
      %71 = dma.vmem_to_hbm [thread:$0]  %s67, 128, %s69, [#allocation5]
    $region13: #{tpu_custom_call.1} parent=1 // pred_fallthru
      _
    // Predicated region
    $region14: #{tpu_custom_call.1} parent=1 // pred_check
      _
    $region15: #{tpu_custom_call.1} parent=1 // pred_check_branch
      %73 = sbr.rel (0) target = $region17
    $region16: #{tpu_custom_call.1} parent=1 // pred_region
      %75 = dma.done [#allocation5], 128
    $region17: #{tpu_custom_call.1} parent=1 // pred_fallthru
      _
    %76 = vsyncpa [#allocation5], 1

</llo_original>
